<compile_context>
chip_gen: v5e
topology: v5e:2x2
jax: 0.10.0
libtpu: 0.0.40
codegen_flags: <defaults>
</compile_context>

<pallas_src>
import jax
import jax.numpy as jnp
from jax.experimental import pallas as pl
from jax.experimental.pallas import tpu as pltpu

LANE = 128  # TPU vreg lane width


def _round_up(n, m):
    return ((n + m - 1) // m) * m


def mlp_kernel(x_ref,
               w0_ref, b0_ref,
               w1_ref, b1_ref,
               w2_ref, b2_ref,
               w3_ref, b3_ref,
               o_ref):
    """Fused 4-layer MLP (3 hidden ReLU layers + linear head) on one batch tile.

    x_ref: [tile, dim_in] f32 (cast to bf16 here), hidden dims padded to 128,
    output dim unpadded. Matmuls are bf16 x bf16 -> f32 on the MXU.
    """
    h = x_ref[...].astype(w0_ref.dtype)  # f32 -> bf16 cast in-kernel (free VPU)

    # hidden layer 0
    h = jnp.dot(h, w0_ref[...], preferred_element_type=jnp.float32) + b0_ref[...]
    h = jnp.maximum(h, 0.0).astype(w1_ref.dtype)
    # hidden layer 1
    h = jnp.dot(h, w1_ref[...], preferred_element_type=jnp.float32) + b1_ref[...]
    h = jnp.maximum(h, 0.0).astype(w2_ref.dtype)
    # hidden layer 2
    h = jnp.dot(h, w2_ref[...], preferred_element_type=jnp.float32) + b2_ref[...]
    h = jnp.maximum(h, 0.0).astype(w3_ref.dtype)
    # output layer (no activation), output dim unpadded (lane-masked store)
    out = jnp.dot(h, w3_ref[...], preferred_element_type=jnp.float32) + b3_ref[...]

    o_ref[...] = out.astype(o_ref.dtype)


def prepare_params(params, compute_dtype=jnp.bfloat16):
    """One-time (init-time) packing: pad hidden feature dims to 128 lanes and
    cast weights to bf16. Layer-0 input dim and last-layer output dim stay
    unpadded. Returns flat [w0, b0, w1, b1, w2, b2, w3, b3]."""
    n = len(params)
    flat = []
    for li, (w, b) in enumerate(params):
        in_dim, out_dim = w.shape
        in_p = in_dim if li == 0 else _round_up(in_dim, LANE)
        out_p = out_dim if li == n - 1 else _round_up(out_dim, LANE)
        wp = jnp.zeros((in_p, out_p), compute_dtype)
        wp = wp.at[:in_dim, :out_dim].set(w.astype(compute_dtype))
        bp = jnp.zeros((1, out_p), jnp.float32)
        bp = bp.at[:, :out_dim].set(b.reshape(1, -1).astype(jnp.float32))
        flat += [wp, bp]
    return flat


def simple_mlp_forward(x, flat_params, *, batch_tile=None):
    """x: [B, dim_in] f32; flat_params: output of prepare_params (8 arrays)."""
    assert len(flat_params) == 8, "kernel is fused for 3 hidden layers + head"
    B, dim_in = x.shape
    dim_out = flat_params[-1].shape[-1]

    # ---- batch tile: aim for >=2 parallel grid steps (v7x has 2 TCs) while
    #      keeping tiles large enough to amortize ~0.35us/step overhead.
    #      Per-tile VMEM at 1024 rows is ~2 MiB -> safe on v5e/v6e/v7x. ----
    if batch_tile is None:
        half = _round_up(pl.cdiv(B, 2), 8)
        batch_tile = max(8, min(1024, half))
    batch_tile = _round_up(batch_tile, 8)
    grid = pl.cdiv(B, batch_tile)  # ragged last block: masked stores, no pad pass

    # ---- advisory cost estimate for XLA scheduling around the custom call ----
    weights = flat_params[0::2]
    biases = flat_params[1::2]
    flops = sum(2 * B * w.shape[0] * w.shape[1] for w in weights)
    bytes_accessed = (B * dim_in * 4 + B * dim_out * 4
                      + sum(w.size * w.dtype.itemsize for w in weights)
                      + sum(b.size * 4 for b in biases))
    cost = pl.CostEstimate(flops=flops, transcendentals=0,
                           bytes_accessed=bytes_accessed)

    def weight_spec(arr):
        # small weights/biases: constant block index -> VMEM-resident
        return pl.BlockSpec(arr.shape, lambda i: (0, 0))

    out = pl.pallas_call(
        mlp_kernel,
        out_shape=jax.ShapeDtypeStruct((B, dim_out), jnp.float32),
        grid_spec=pl.GridSpec(
            grid=(grid,),
            in_specs=[pl.BlockSpec((batch_tile, dim_in), lambda i: (i, 0))]
                     + [weight_spec(a) for a in flat_params],
            out_specs=pl.BlockSpec((batch_tile, dim_out), lambda i: (i, 0)),
        ),
        compiler_params=pltpu.CompilerParams(
            dimension_semantics=("parallel",)),
        cost_estimate=cost,
    )(x, *flat_params)

    return out


def init_params(key, dims):
    """Deterministic init mimicking nn.Linear's U(-1/sqrt(fan_in), 1/sqrt(fan_in))."""
    params = []
    for i in range(1, len(dims)):
        fan_in, fan_out = dims[i - 1], dims[i]
        key, kw, kb = jax.random.split(key, 3)
        bound = 1.0 / jnp.sqrt(fan_in)
        # stored as [in, out] so the kernel does x @ W
        w = jax.random.uniform(kw, (fan_in, fan_out), jnp.float32, -bound, bound)
        b = jax.random.uniform(kb, (1, fan_out), jnp.float32, -bound, bound)
        params.append((w, b))
    return params


def reference_forward(x, params, compute_dtype=jnp.bfloat16):
    """Pure-JAX reference with the same bf16-input / f32-accumulate numerics."""
    h = x.astype(compute_dtype)
    n = len(params)
    for i, (w, b) in enumerate(params):
        h = jnp.dot(h, w.astype(compute_dtype),
                    preferred_element_type=jnp.float32) + b.astype(jnp.float32)
        if i < n - 1:
            h = jnp.maximum(h, 0.0).astype(compute_dtype)
    return h


if __name__ == "__main__":
    # simple_MLP(dim_in=32, dim_out=8, dim_hidden=[64, 64, 64], activation='relu')
    dim_in, dim_out = 32, 8
    dim_hidden = [64, 64, 64]
    dims = [dim_in] + dim_hidden + [dim_out]

    key = jax.random.PRNGKey(0)
    key, kx = jax.random.split(key)
    B = 16
    x = jax.random.normal(kx, (B, dim_in), dtype=jnp.float32)

    params = init_params(key, dims)
    flat_params = prepare_params(params)  # one-time pad/cast (hoisted out of forward)

    fwd = jax.jit(simple_mlp_forward, static_argnames=("batch_tile",))
    out = fwd(x, flat_params)
    out = jax.block_until_ready(out)

    ref = reference_forward(x, params)
    assert out.shape == (B, dim_out)
    assert jnp.allclose(out, ref, atol=1e-3, rtol=1e-3), "mismatch vs reference"

    print("KERNEL_OK")
</pallas_src>

<mosaic_0001>
module attributes {stable_mosaic.version = 11 : i64} {
  func.func @mlp_kernel(%arg0: i32, %arg1: memref<8x32xf32, #tpu.memory_space<vmem>>, %arg2: memref<32x128xbf16, #tpu.memory_space<vmem>>, %arg3: memref<1x128xf32, #tpu.memory_space<vmem>>, %arg4: memref<128x128xbf16, #tpu.memory_space<vmem>>, %arg5: memref<1x128xf32, #tpu.memory_space<vmem>>, %arg6: memref<128x128xbf16, #tpu.memory_space<vmem>>, %arg7: memref<1x128xf32, #tpu.memory_space<vmem>>, %arg8: memref<128x8xbf16, #tpu.memory_space<vmem>>, %arg9: memref<1x8xf32, #tpu.memory_space<vmem>>, %arg10: memref<8x8xf32, #tpu.memory_space<vmem>>) attributes {dimension_semantics = [#tpu.dimension_semantics<parallel>], iteration_bounds = array<i64: 2>, scalar_prefetch = 0 : i64, scratch_operands = 0 : i64, tpu.core_type = #tpu.core_type<tc>, window_params = [{transform_indices = @transform_0, window_bounds = array<i64: 8, 32>}, {pipeline_mode = #tpu.pipeline_mode<synchronous>, transform_indices = @transform_1, window_bounds = array<i64: 32, 128>}, {pipeline_mode = #tpu.pipeline_mode<synchronous>, transform_indices = @transform_2, window_bounds = array<i64: 1, 128>}, {pipeline_mode = #tpu.pipeline_mode<synchronous>, transform_indices = @transform_3, window_bounds = array<i64: 128, 128>}, {pipeline_mode = #tpu.pipeline_mode<synchronous>, transform_indices = @transform_4, window_bounds = array<i64: 1, 128>}, {pipeline_mode = #tpu.pipeline_mode<synchronous>, transform_indices = @transform_5, window_bounds = array<i64: 128, 128>}, {pipeline_mode = #tpu.pipeline_mode<synchronous>, transform_indices = @transform_6, window_bounds = array<i64: 1, 128>}, {pipeline_mode = #tpu.pipeline_mode<synchronous>, transform_indices = @transform_7, window_bounds = array<i64: 128, 8>}, {pipeline_mode = #tpu.pipeline_mode<synchronous>, transform_indices = @transform_8, window_bounds = array<i64: 1, 8>}, {transform_indices = @transform_9, window_bounds = array<i64: 8, 8>}]} {
    %c0 = arith.constant 0 : index
    %c0_0 = arith.constant 0 : index
    %0 = vector.load %arg1[%c0, %c0_0] : memref<8x32xf32, #tpu.memory_space<vmem>>, vector<8x32xf32>
    %1 = arith.truncf %0 : vector<8x32xf32> to vector<8x32xbf16>
    %c0_1 = arith.constant 0 : index
    %c0_2 = arith.constant 0 : index
    %2 = vector.load %arg2[%c0_1, %c0_2] : memref<32x128xbf16, #tpu.memory_space<vmem>>, vector<32x128xbf16>
    %cst = arith.constant dense<0.000000e+00> : vector<8x128xf32>
    %3 = tpu.matmul %1, %2, %cst {dimension_numbers = #tpu.dot_dimension_numbers<[1], [0], [0], [1], [0, 0, 1, 1], [], []>} : vector<8x32xbf16>, vector<32x128xbf16>, vector<8x128xf32> -> vector<8x128xf32>
    %c0_3 = arith.constant 0 : index
    %c0_4 = arith.constant 0 : index
    %4 = vector.load %arg3[%c0_3, %c0_4] : memref<1x128xf32, #tpu.memory_space<vmem>>, vector<1x128xf32>
    %5 = vector.broadcast %4 : vector<1x128xf32> to vector<8x128xf32>
    %6 = arith.addf %3, %5 : vector<8x128xf32>
    %cst_5 = arith.constant 0.000000e+00 : f32
    %7 = vector.broadcast %cst_5 : f32 to vector<8x128xf32>
    %8 = arith.maximumf %6, %7 : vector<8x128xf32>
    %9 = arith.truncf %8 : vector<8x128xf32> to vector<8x128xbf16>
    %c0_6 = arith.constant 0 : index
    %c0_7 = arith.constant 0 : index
    %10 = vector.load %arg4[%c0_6, %c0_7] : memref<128x128xbf16, #tpu.memory_space<vmem>>, vector<128x128xbf16>
    %cst_8 = arith.constant dense<0.000000e+00> : vector<8x128xf32>
    %11 = tpu.matmul %9, %10, %cst_8 {dimension_numbers = #tpu.dot_dimension_numbers<[1], [0], [0], [1], [0, 0, 1, 1], [], []>} : vector<8x128xbf16>, vector<128x128xbf16>, vector<8x128xf32> -> vector<8x128xf32>
    %c0_9 = arith.constant 0 : index
    %c0_10 = arith.constant 0 : index
    %12 = vector.load %arg5[%c0_9, %c0_10] : memref<1x128xf32, #tpu.memory_space<vmem>>, vector<1x128xf32>
    %13 = vector.broadcast %12 : vector<1x128xf32> to vector<8x128xf32>
    %14 = arith.addf %11, %13 : vector<8x128xf32>
    %cst_11 = arith.constant 0.000000e+00 : f32
    %15 = vector.broadcast %cst_11 : f32 to vector<8x128xf32>
    %16 = arith.maximumf %14, %15 : vector<8x128xf32>
    %17 = arith.truncf %16 : vector<8x128xf32> to vector<8x128xbf16>
    %c0_12 = arith.constant 0 : index
    %c0_13 = arith.constant 0 : index
    %18 = vector.load %arg6[%c0_12, %c0_13] : memref<128x128xbf16, #tpu.memory_space<vmem>>, vector<128x128xbf16>
    %cst_14 = arith.constant dense<0.000000e+00> : vector<8x128xf32>
    %19 = tpu.matmul %17, %18, %cst_14 {dimension_numbers = #tpu.dot_dimension_numbers<[1], [0], [0], [1], [0, 0, 1, 1], [], []>} : vector<8x128xbf16>, vector<128x128xbf16>, vector<8x128xf32> -> vector<8x128xf32>
    %c0_15 = arith.constant 0 : index
    %c0_16 = arith.constant 0 : index
    %20 = vector.load %arg7[%c0_15, %c0_16] : memref<1x128xf32, #tpu.memory_space<vmem>>, vector<1x128xf32>
    %21 = vector.broadcast %20 : vector<1x128xf32> to vector<8x128xf32>
    %22 = arith.addf %19, %21 : vector<8x128xf32>
    %cst_17 = arith.constant 0.000000e+00 : f32
    %23 = vector.broadcast %cst_17 : f32 to vector<8x128xf32>
    %24 = arith.maximumf %22, %23 : vector<8x128xf32>
    %25 = arith.truncf %24 : vector<8x128xf32> to vector<8x128xbf16>
    %c0_18 = arith.constant 0 : index
    %c0_19 = arith.constant 0 : index
    %26 = vector.load %arg8[%c0_18, %c0_19] : memref<128x8xbf16, #tpu.memory_space<vmem>>, vector<128x8xbf16>
    %cst_20 = arith.constant dense<0.000000e+00> : vector<8x8xf32>
    %27 = tpu.matmul %25, %26, %cst_20 {dimension_numbers = #tpu.dot_dimension_numbers<[1], [0], [0], [1], [0, 0, 1, 1], [], []>} : vector<8x128xbf16>, vector<128x8xbf16>, vector<8x8xf32> -> vector<8x8xf32>
    %c0_21 = arith.constant 0 : index
    %c0_22 = arith.constant 0 : index
    %28 = vector.load %arg9[%c0_21, %c0_22] : memref<1x8xf32, #tpu.memory_space<vmem>>, vector<1x8xf32>
    %29 = vector.broadcast %28 : vector<1x8xf32> to vector<8x8xf32>
    %30 = arith.addf %27, %29 : vector<8x8xf32>
    %c0_23 = arith.constant 0 : index
    %c0_24 = arith.constant 0 : index
    %31 = vector.load %arg10[%c0_23, %c0_24] : memref<8x8xf32, #tpu.memory_space<vmem>>, vector<8x8xf32>
    tpu.vector_store %arg10[%c0_23, %c0_24], %30 {strides = array<i32>} : memref<8x8xf32, #tpu.memory_space<vmem>>, vector<8x8xf32>,
    return
  }
  func.func @transform_0(%arg0: i32) -> (i32, i32) {
    %c0_i32 = arith.constant 0 : i32
    %c0_i32_0 = arith.constant 0 : i32
    return %arg0, %c0_i32 : i32, i32
  }
  func.func @transform_1(%arg0: i32) -> (i32, i32) {
    %c0_i32 = arith.constant 0 : i32
    %c0_i32_0 = arith.constant 0 : i32
    %c0_i32_1 = arith.constant 0 : i32
    return %c0_i32, %c0_i32_0 : i32, i32
  }
  func.func @transform_2(%arg0: i32) -> (i32, i32) {
    %c0_i32 = arith.constant 0 : i32
    %c0_i32_0 = arith.constant 0 : i32
    %c0_i32_1 = arith.constant 0 : i32
    return %c0_i32, %c0_i32_0 : i32, i32
  }
  func.func @transform_3(%arg0: i32) -> (i32, i32) {
    %c0_i32 = arith.constant 0 : i32
    %c0_i32_0 = arith.constant 0 : i32
    %c0_i32_1 = arith.constant 0 : i32
    return %c0_i32, %c0_i32_0 : i32, i32
  }
  func.func @transform_4(%arg0: i32) -> (i32, i32) {
    %c0_i32 = arith.constant 0 : i32
    %c0_i32_0 = arith.constant 0 : i32
    %c0_i32_1 = arith.constant 0 : i32
    return %c0_i32, %c0_i32_0 : i32, i32
  }
  func.func @transform_5(%arg0: i32) -> (i32, i32) {
    %c0_i32 = arith.constant 0 : i32
    %c0_i32_0 = arith.constant 0 : i32
    %c0_i32_1 = arith.constant 0 : i32
    return %c0_i32, %c0_i32_0 : i32, i32
  }
  func.func @transform_6(%arg0: i32) -> (i32, i32) {
    %c0_i32 = arith.constant 0 : i32
    %c0_i32_0 = arith.constant 0 : i32
    %c0_i32_1 = arith.constant 0 : i32
    return %c0_i32, %c0_i32_0 : i32, i32
  }
  func.func @transform_7(%arg0: i32) -> (i32, i32) {
    %c0_i32 = arith.constant 0 : i32
    %c0_i32_0 = arith.constant 0 : i32
    %c0_i32_1 = arith.constant 0 : i32
    return %c0_i32, %c0_i32_0 : i32, i32
  }
  func.func @transform_8(%arg0: i32) -> (i32, i32) {
    %c0_i32 = arith.constant 0 : i32
    %c0_i32_0 = arith.constant 0 : i32
    %c0_i32_1 = arith.constant 0 : i32
    return %c0_i32, %c0_i32_0 : i32, i32
  }
  func.func @transform_9(%arg0: i32) -> (i32, i32) {
    %c0_i32 = arith.constant 0 : i32
    %c0_i32_0 = arith.constant 0 : i32
    return %arg0, %c0_i32 : i32, i32
  }
}

</mosaic_0001>

<llo_original>
// kernel: simple_mlp_forward.1
$region0: #{simple_mlp_forward.1}
  #allocation0 [shape = 'u32[]', space=smem, size = 0x4, offset = 0x4, fixed_abs, tag = 'smem constant byte address 0x4 - core index']
  #allocation1 [shape = 'u32[72,128]{1,0:T(1,128)}', space=vmem, size = 0x9000, scoped, tag = 'internal scratch']
  %s0 = inlined_call_operand.hbm [shape: f32[16,32], index: 0, kind: input, shape index: {}]
  %s1 = inlined_call_operand.hbm [shape: bf16[32,128], index: 1, kind: input, shape index: {}]
  %s2 = inlined_call_operand.vmem [shape: f32[1,128], index: 2, kind: input, shape index: {}]
  %s3 = inlined_call_operand.vmem [shape: bf16[128,128], index: 3, kind: input, shape index: {}]
  %s4 = inlined_call_operand.vmem [shape: f32[1,128], index: 4, kind: input, shape index: {}]
  %s5 = inlined_call_operand.hbm [shape: bf16[128,128], index: 5, kind: input, shape index: {}]
  %s6 = inlined_call_operand.vmem [shape: f32[1,128], index: 6, kind: input, shape index: {}]
  %s7 = inlined_call_operand.vmem [shape: bf16[128,8], index: 7, kind: input, shape index: {}]
  %s8 = inlined_call_operand.vmem [shape: f32[1,8], index: 8, kind: input, shape index: {}]
  %s9 = inlined_call_operand.vmem [shape: f32[16,8], index: 9, kind: output, shape index: {}]
  %s10 = sld [smem:[#allocation0]]
  $region81: #{simple_mlp_forward.1} parent=0
    _
  %s12 = ssub.s32 1, %s10
  %s13 = scalar_select 0, %s12, %s10
  $region1: #{simple_mlp_forward.1} parent=0
    #allocation2 [shape = 'u8[8192]{0}', space=vmem, size = 0x2000, scoped, tag = 'input window, operand 0']
    #allocation3 [shape = 's32[2]{0}', space=sflag, size = 0x8, scoped, tag = 'scoped memory for simple_mlp_forward.1']
    #allocation4 [shape = 'u8[8192]{0}', space=vmem, size = 0x2000, scoped, tag = 'input window, operand 1, single buffered']
    #allocation5 [shape = 's32[1]{0}', space=sflag, size = 0x4, scoped, tag = 'scoped memory for simple_mlp_forward.1']
    #allocation6 [shape = 'u8[32768]{0}', space=vmem, size = 0x8000, scoped, tag = 'input window, operand 5, single buffered']
    %14 = vsyncpa [#allocation3], 0
    %s15 = scalar_lea.sflag [#allocation3], 1
    %16 = vsyncpa %s15, 0
    %17 = vsyncpa [#allocation5], 0
    loop: start=0, step=1, limit=4
    $region2: #{simple_mlp_forward.1} parent=1 // loop_pre_header
      _
    $region3: #{simple_mlp_forward.1} parent=1 // loop_header
      %s19 = sphi 0, %s23
      %p20 = scmp.ge.s32.totalorder %s19, 4
      %s29 = sphi 0, %s31
      %s32 = sphi 0, %s29
      %s33 = sphi 0, %s32
      %s49 = sphi 0, %s33
      %s53 = sphi 0, %s53
      %s55 = sphi 0, %s53
      %s56 = sphi 0, %s55
      %s70 = sphi 0, %s56
      %s74 = sphi 0, %s74
      %s76 = sphi 0, %s74
      %s77 = sphi 0, %s76
      %s91 = sphi 0, %s77
      %s95 = sphi 0, %s95
      %s97 = sphi 0, %s95
      %s98 = sphi 0, %s97
      %s112 = sphi 0, %s98
      %s116 = sphi 0, %s116
      %s118 = sphi 0, %s116
      %s119 = sphi 0, %s118
      %s133 = sphi 0, %s119
      %s137 = sphi 0, %s137
      %s139 = sphi 0, %s137
      %s140 = sphi 0, %s139
      %s154 = sphi 0, %s140
      %s158 = sphi 0, %s158
      %s160 = sphi 0, %s158
      %s161 = sphi 0, %s160
      %s175 = sphi 0, %s161
      %s179 = sphi 0, %s179
      %s181 = sphi 0, %s179
      %s182 = sphi 0, %s181
      %s196 = sphi 0, %s182
      %s200 = sphi 0, %s200
      %s202 = sphi 0, %s200
      %s203 = sphi 0, %s202
      %s217 = sphi 0, %s203
      %s223 = sphi 0, %s225
      %s226 = sphi 0, %s223
      %s227 = sphi 0, %s226
      %s243 = sphi 0, %s227
    $region4: #{simple_mlp_forward.1} parent=1 // loop_header_branch
      %22 = sbr.rel (%p20) target = $region8
    $region5: #{simple_mlp_forward.1} parent=1 // loop_body
      %s24 = ssub.s32 %s19, 1
      %s25 = ssub.s32 %s19, 2
      %s26 = sadd.s32 %s19, 1
      %s27 = ssub.s32 %s19, %s26
      %p28 = scmp.eq.s32.totalorder %s27, 0
      %s30 = sadd.s32 %s29, 1
      %s31 = scalar_select %p28, %s29, %s30
      %p34 = pneg %p28
      %p35 = scmp.eq.s32.totalorder %s19, 1
      %p36 = por %p34, %p35
      %p37 = scmp.ne.s32.totalorder %s29, %s32
      %p38 = scmp.eq.s32.totalorder %s19, 0
      %p39 = por %p37, %p38
      %p40 = scmp.ne.s32.totalorder %s29, %s32
      %p41 = scmp.eq.s32.totalorder %s24, 1
      %p42 = por %p40, %p41
      %p43 = scmp.ne.s32.totalorder %s32, %s33
      %p44 = scmp.eq.s32.totalorder %s24, 0
      %p45 = por %p43, %p44
      %p46 = scmp.ne.s32.totalorder %s32, %s33
      %p47 = scmp.eq.s32.totalorder %s25, 1
      %p48 = por %p46, %p47
      %p50 = scmp.ne.s32.totalorder %s33, %s49
      %p51 = scmp.eq.s32.totalorder %s25, 0
      %p52 = por %p50, %p51
      %s54 = sadd.s32 %s53, 1
      %p57 = scmp.eq.s32.totalorder %s19, 1
      %p58 = scmp.ne.s32.totalorder %s53, %s55
      %p59 = scmp.eq.s32.totalorder %s19, 0
      %p60 = por %p58, %p59
      %p61 = scmp.ne.s32.totalorder %s53, %s55
      %p62 = scmp.eq.s32.totalorder %s24, 1
      %p63 = por %p61, %p62
      %p64 = scmp.ne.s32.totalorder %s55, %s56
      %p65 = scmp.eq.s32.totalorder %s24, 0
      %p66 = por %p64, %p65
      %p67 = scmp.ne.s32.totalorder %s55, %s56
      %p68 = scmp.eq.s32.totalorder %s25, 1
      %p69 = por %p67, %p68
      %p71 = scmp.ne.s32.totalorder %s56, %s70
      %p72 = scmp.eq.s32.totalorder %s25, 0
      %p73 = por %p71, %p72
      %s75 = sadd.s32 %s74, 1
      %p78 = scmp.eq.s32.totalorder %s19, 1
      %p79 = scmp.ne.s32.totalorder %s74, %s76
      %p80 = scmp.eq.s32.totalorder %s19, 0
      %p81 = por %p79, %p80
      %p82 = scmp.ne.s32.totalorder %s74, %s76
      %p83 = scmp.eq.s32.totalorder %s24, 1
      %p84 = por %p82, %p83
      %p85 = scmp.ne.s32.totalorder %s76, %s77
      %p86 = scmp.eq.s32.totalorder %s24, 0
      %p87 = por %p85, %p86
      %p88 = scmp.ne.s32.totalorder %s76, %s77
      %p89 = scmp.eq.s32.totalorder %s25, 1
      %p90 = por %p88, %p89
      %p92 = scmp.ne.s32.totalorder %s77, %s91
      %p93 = scmp.eq.s32.totalorder %s25, 0
      %p94 = por %p92, %p93
      %s96 = sadd.s32 %s95, 1
      %p99 = scmp.eq.s32.totalorder %s19, 1
      %p100 = scmp.ne.s32.totalorder %s95, %s97
      %p101 = scmp.eq.s32.totalorder %s19, 0
      %p102 = por %p100, %p101
      %p103 = scmp.ne.s32.totalorder %s95, %s97
      %p104 = scmp.eq.s32.totalorder %s24, 1
      %p105 = por %p103, %p104
      %p106 = scmp.ne.s32.totalorder %s97, %s98
      %p107 = scmp.eq.s32.totalorder %s24, 0
      %p108 = por %p106, %p107
      %p109 = scmp.ne.s32.totalorder %s97, %s98
      %p110 = scmp.eq.s32.totalorder %s25, 1
      %p111 = por %p109, %p110
      %p113 = scmp.ne.s32.totalorder %s98, %s112
      %p114 = scmp.eq.s32.totalorder %s25, 0
      %p115 = por %p113, %p114
      %s117 = sadd.s32 %s116, 1
      %p120 = scmp.eq.s32.totalorder %s19, 1
      %p121 = scmp.ne.s32.totalorder %s116, %s118
      %p122 = scmp.eq.s32.totalorder %s19, 0
      %p123 = por %p121, %p122
      %p124 = scmp.ne.s32.totalorder %s116, %s118
      %p125 = scmp.eq.s32.totalorder %s24, 1
      %p126 = por %p124, %p125
      %p127 = scmp.ne.s32.totalorder %s118, %s119
      %p128 = scmp.eq.s32.totalorder %s24, 0
      %p129 = por %p127, %p128
      %p130 = scmp.ne.s32.totalorder %s118, %s119
      %p131 = scmp.eq.s32.totalorder %s25, 1
      %p132 = por %p130, %p131
      %p134 = scmp.ne.s32.totalorder %s119, %s133
      %p135 = scmp.eq.s32.totalorder %s25, 0
      %p136 = por %p134, %p135
      %s138 = sadd.s32 %s137, 1
      %p141 = scmp.eq.s32.totalorder %s19, 1
      %p142 = scmp.ne.s32.totalorder %s137, %s139
      %p143 = scmp.eq.s32.totalorder %s19, 0
      %p144 = por %p142, %p143
      %p145 = scmp.ne.s32.totalorder %s137, %s139
      %p146 = scmp.eq.s32.totalorder %s24, 1
      %p147 = por %p145, %p146
      %p148 = scmp.ne.s32.totalorder %s139, %s140
      %p149 = scmp.eq.s32.totalorder %s24, 0
      %p150 = por %p148, %p149
      %p151 = scmp.ne.s32.totalorder %s139, %s140
      %p152 = scmp.eq.s32.totalorder %s25, 1
      %p153 = por %p151, %p152
      %p155 = scmp.ne.s32.totalorder %s140, %s154
      %p156 = scmp.eq.s32.totalorder %s25, 0
      %p157 = por %p155, %p156
      %s159 = sadd.s32 %s158, 1
      %p162 = scmp.eq.s32.totalorder %s19, 1
      %p163 = scmp.ne.s32.totalorder %s158, %s160
      %p164 = scmp.eq.s32.totalorder %s19, 0
      %p165 = por %p163, %p164
      %p166 = scmp.ne.s32.totalorder %s158, %s160
      %p167 = scmp.eq.s32.totalorder %s24, 1
      %p168 = por %p166, %p167
      %p169 = scmp.ne.s32.totalorder %s160, %s161
      %p170 = scmp.eq.s32.totalorder %s24, 0
      %p171 = por %p169, %p170
      %p172 = scmp.ne.s32.totalorder %s160, %s161
      %p173 = scmp.eq.s32.totalorder %s25, 1
      %p174 = por %p172, %p173
      %p176 = scmp.ne.s32.totalorder %s161, %s175
      %p177 = scmp.eq.s32.totalorder %s25, 0
      %p178 = por %p176, %p177
      %s180 = sadd.s32 %s179, 1
      %p183 = scmp.eq.s32.totalorder %s19, 1
      %p184 = scmp.ne.s32.totalorder %s179, %s181
      %p185 = scmp.eq.s32.totalorder %s19, 0
      %p186 = por %p184, %p185
      %p187 = scmp.ne.s32.totalorder %s179, %s181
      %p188 = scmp.eq.s32.totalorder %s24, 1
      %p189 = por %p187, %p188
      %p190 = scmp.ne.s32.totalorder %s181, %s182
      %p191 = scmp.eq.s32.totalorder %s24, 0
      %p192 = por %p190, %p191
      %p193 = scmp.ne.s32.totalorder %s181, %s182
      %p194 = scmp.eq.s32.totalorder %s25, 1
      %p195 = por %p193, %p194
      %p197 = scmp.ne.s32.totalorder %s182, %s196
      %p198 = scmp.eq.s32.totalorder %s25, 0
      %p199 = por %p197, %p198
      %s201 = sadd.s32 %s200, 1
      %p204 = scmp.eq.s32.totalorder %s19, 1
      %p205 = scmp.ne.s32.totalorder %s200, %s202
      %p206 = scmp.eq.s32.totalorder %s19, 0
      %p207 = por %p205, %p206
      %p208 = scmp.ne.s32.totalorder %s200, %s202
      %p209 = scmp.eq.s32.totalorder %s24, 1
      %p210 = por %p208, %p209
      %p211 = scmp.ne.s32.totalorder %s202, %s203
      %p212 = scmp.eq.s32.totalorder %s24, 0
      %p213 = por %p211, %p212
      %p214 = scmp.ne.s32.totalorder %s202, %s203
      %p215 = scmp.eq.s32.totalorder %s25, 1
      %p216 = por %p214, %p215
      %p218 = scmp.ne.s32.totalorder %s203, %s217
      %p219 = scmp.eq.s32.totalorder %s25, 0
      %p220 = por %p218, %p219
      %s221 = ssub.s32 %s19, %s26
      %p222 = scmp.eq.s32.totalorder %s221, 0
      %s224 = sadd.s32 %s223, 1
      %s225 = scalar_select %p222, %s223, %s224
      %p228 = pneg %p222
      %p229 = scmp.eq.s32.totalorder %s19, 1
      %p230 = por %p228, %p229
      %p231 = scmp.ne.s32.totalorder %s223, %s226
      %p232 = scmp.eq.s32.totalorder %s19, 0
      %p233 = por %p231, %p232
      %p234 = scmp.ne.s32.totalorder %s223, %s226
      %p235 = scmp.eq.s32.totalorder %s24, 1
      %p236 = por %p234, %p235
      %p237 = scmp.ne.s32.totalorder %s226, %s227
      %p238 = scmp.eq.s32.totalorder %s24, 0
      %p239 = por %p237, %p238
      %p240 = scmp.ne.s32.totalorder %s226, %s227
      %p241 = scmp.eq.s32.totalorder %s25, 1
      %p242 = por %p240, %p241
      %p244 = scmp.ne.s32.totalorder %s227, %s243
      %p245 = scmp.eq.s32.totalorder %s25, 0
      %p246 = por %p244, %p245
      %p247 = scmp.le.s32.totalorder 1, %s19
      %p248 = scmp.lt.s32.totalorder %s19, 3
      %p249 = pnand %p247, %p248
      %p250 = pneg %p249
      // Predicated region
      $region9: #{simple_mlp_forward.1} parent=5 // pred_check
        _
      $region10: #{simple_mlp_forward.1} parent=5 // pred_check_branch
        %252 = sbr.rel (%p249) target = $region12
      $region11: #{simple_mlp_forward.1} parent=5 // pred_region
        %s253 = ssub.s32 %s19, 1
        // Predicated region
        $region13: #{simple_mlp_forward.1} parent=11 // pred_check
          %p254 = pneg %p66
        $region14: #{simple_mlp_forward.1} parent=11 // pred_check_branch
          %256 = sbr.rel (%p254) target = $region16
        $region15: #{simple_mlp_forward.1} parent=11 // pred_region
          %258 = vsyncadd [#allocation5], 0
          %s259 = sshll.u32 %s1, 4
          %s260 = int_to_ptr.hbm [resolvable:$true] %s259
          %s261 = sshll.u32 [#allocation4], 4
          %s262 = int_to_ptr.vmem [resolvable:$true] %s261
          %267 = dma.hbm_to_vmem [thread:$0]  %s260, 256, %s262, [#allocation5], 64, 64, 4
        $region16: #{simple_mlp_forward.1} parent=11 // pred_fallthru
          _
        // Predicated region
        $region17: #{simple_mlp_forward.1} parent=11 // pred_check
          %p268 = pneg %p87
        $region18: #{simple_mlp_forward.1} parent=11 // pred_check_branch
          %270 = sbr.rel (%p268) target = $region20
        $region19: #{simple_mlp_forward.1} parent=11 // pred_region
          _
        $region20: #{simple_mlp_forward.1} parent=11 // pred_fallthru
          _
        // Predicated region
        $region21: #{simple_mlp_forward.1} parent=11 // pred_check
          %p271 = pneg %p108
        $region22: #{simple_mlp_forward.1} parent=11 // pred_check_branch
          %273 = sbr.rel (%p271) target = $region24
        $region23: #{simple_mlp_forward.1} parent=11 // pred_region
          _
        $region24: #{simple_mlp_forward.1} parent=11 // pred_fallthru
          _
        // Predicated region
        $region25: #{simple_mlp_forward.1} parent=11 // pred_check
          %p274 = pneg %p129
        $region26: #{simple_mlp_forward.1} parent=11 // pred_check_branch
          %276 = sbr.rel (%p274) target = $region28
        $region27: #{simple_mlp_forward.1} parent=11 // pred_region
          _
        $region28: #{simple_mlp_forward.1} parent=11 // pred_fallthru
          _
        // Predicated region
        $region29: #{simple_mlp_forward.1} parent=11 // pred_check
          %p277 = pneg %p150
        $region30: #{simple_mlp_forward.1} parent=11 // pred_check_branch
          %279 = sbr.rel (%p277) target = $region32
        $region31: #{simple_mlp_forward.1} parent=11 // pred_region
          %281 = vsyncadd [#allocation5], 0
          %s282 = sshll.u32 %s5, 4
          %s283 = int_to_ptr.hbm [resolvable:$true] %s282
          %s284 = sshll.u32 [#allocation6], 4
          %s285 = int_to_ptr.vmem [resolvable:$true] %s284
          %290 = dma.hbm_to_vmem [thread:$0]  %s283, 1024, %s285, [#allocation5], 64, 64, 4
        $region32: #{simple_mlp_forward.1} parent=11 // pred_fallthru
          _
        // Predicated region
        $region33: #{simple_mlp_forward.1} parent=11 // pred_check
          %p291 = pneg %p171
        $region34: #{simple_mlp_forward.1} parent=11 // pred_check_branch
          %293 = sbr.rel (%p291) target = $region36
        $region35: #{simple_mlp_forward.1} parent=11 // pred_region
          _
        $region36: #{simple_mlp_forward.1} parent=11 // pred_fallthru
          _
        // Predicated region
        $region37: #{simple_mlp_forward.1} parent=11 // pred_check
          %p294 = pneg %p192
        $region38: #{simple_mlp_forward.1} parent=11 // pred_check_branch
          %296 = sbr.rel (%p294) target = $region40
        $region39: #{simple_mlp_forward.1} parent=11 // pred_region
          _
        $region40: #{simple_mlp_forward.1} parent=11 // pred_fallthru
          _
        // Predicated region
        $region41: #{simple_mlp_forward.1} parent=11 // pred_check
          %p297 = pneg %p213
        $region42: #{simple_mlp_forward.1} parent=11 // pred_check_branch
          %299 = sbr.rel (%p297) target = $region44
        $region43: #{simple_mlp_forward.1} parent=11 // pred_region
          _
        $region44: #{simple_mlp_forward.1} parent=11 // pred_fallthru
          _
      $region12: #{simple_mlp_forward.1} parent=5 // pred_fallthru
        _
      %p300 = scmp.lt.s32.totalorder %s19, 2
      // Predicated region
      $region45: #{simple_mlp_forward.1} parent=5 // pred_check
        %p301 = pneg %p300
      $region46: #{simple_mlp_forward.1} parent=5 // pred_check_branch
        %303 = sbr.rel (%p301) target = $region48
      $region47: #{simple_mlp_forward.1} parent=5 // pred_region
        // Predicated region
        $region49: #{simple_mlp_forward.1} parent=47 // pred_check
          %p304 = pneg %p39
        $region50: #{simple_mlp_forward.1} parent=47 // pred_check_branch
          %306 = sbr.rel (%p304) target = $region52
        $region51: #{simple_mlp_forward.1} parent=47 // pred_region
          %s307 = sand.u32 %s29, 1
          %s308 = scalar_lea.sflag [#allocation3], %s307
          %s309 = sand.u32 %s29, 1
          %s310 = smul.addr %s309, 8
          %s311 = scalar_lea.vmem [#allocation2], %s310
          %313 = vsyncadd %s308, 0
          %s314 = smul.addr %s19, 8
          %s315 = scalar_lea.hbm %s0, %s314
          %s317 = sshll.u32 %s315, 4
          %s318 = int_to_ptr.hbm [resolvable:$true] %s317
          %s319 = sshll.u32 %s311, 4
          %s320 = int_to_ptr.vmem [resolvable:$true] %s319
          %322 = dma.hbm_to_vmem [thread:$0]  %s318, 128, %s320, %s308
        $region52: #{simple_mlp_forward.1} parent=47 // pred_fallthru
          _
      $region48: #{simple_mlp_forward.1} parent=5 // pred_fallthru
        _
      %p323 = scmp.le.s32.totalorder 1, %s19
      %p324 = scmp.lt.s32.totalorder %s19, 3
      %p325 = pnand %p323, %p324
      %p326 = pneg %p325
      // Predicated region
      $region53: #{simple_mlp_forward.1} parent=5 // pred_check
        _
      $region54: #{simple_mlp_forward.1} parent=5 // pred_check_branch
        %328 = sbr.rel (%p325) target = $region56
      $region55: #{simple_mlp_forward.1} parent=5 // pred_region
        %s329 = ssub.s32 %s19, 1
        %s330 = sand.u32 %s32, 1
        %s331 = scalar_lea.sflag [#allocation3], %s330
        %s332 = sand.u32 %s32, 1
        %s333 = smul.addr %s332, 8
        %s334 = scalar_lea.vmem [#allocation2], %s333
        // Predicated region
        $region57: #{simple_mlp_forward.1} parent=55 // pred_check
          %p335 = pneg %p45
        $region58: #{simple_mlp_forward.1} parent=55 // pred_check_branch
          %337 = sbr.rel (%p335) target = $region60
        $region59: #{simple_mlp_forward.1} parent=55 // pred_region
          %339 = dma.done %s331, 128
        $region60: #{simple_mlp_forward.1} parent=55 // pred_fallthru
          _
        // Predicated region
        $region61: #{simple_mlp_forward.1} parent=55 // pred_check
          %p340 = pneg %p66
        $region62: #{simple_mlp_forward.1} parent=55 // pred_check_branch
          %342 = sbr.rel (%p340) target = $region64
        $region63: #{simple_mlp_forward.1} parent=55 // pred_region
          %344 = dma.done [#allocation5], 256
        $region64: #{simple_mlp_forward.1} parent=55 // pred_fallthru
          _
        // Predicated region
        $region65: #{simple_mlp_forward.1} parent=55 // pred_check
          %p345 = pneg %p150
        $region66: #{simple_mlp_forward.1} parent=55 // pred_check_branch
          %347 = sbr.rel (%p345) target = $region68
        $region67: #{simple_mlp_forward.1} parent=55 // pred_region
          %349 = dma.done [#allocation5], 1024
        $region68: #{simple_mlp_forward.1} parent=55 // pred_fallthru
          _
        %s350 = sand.u32 %s32, 1
        %s351 = scalar_lea.sflag [#allocation3], %s350
        %s352 = sand.u32 %s32, 1
        %s353 = smul.addr %s352, 8
        %s354 = scalar_lea.vmem [#allocation2], %s353
        %p355 = pneg %p45
        %p356 = pneg %p42
        %p357 = pneg %p66
        %p358 = pneg %p63
        %p359 = pneg %p87
        %p360 = pneg %p84
        %p361 = pneg %p108
        %p362 = pneg %p105
        %p363 = pneg %p129
        %p364 = pneg %p126
        %p365 = pneg %p150
        %p366 = pneg %p147
        %p367 = pneg %p171
        %p368 = pneg %p168
        %p369 = pneg %p192
        %p370 = pneg %p189
        %p371 = pneg %p213
        %p372 = pneg %p210
        %p373 = pneg %p239
        %p374 = pneg %p236
        %p375 = scmp.lt.s32.totalorder %s24, 1
        %s376 = scalar_select %p375, %s24, 1
        %s377 = smul.addr %s376, 8
        %s378 = scalar_lea.vmem %s9, %s377
        %p379 = scmp.lt.s32.totalorder %s24, 1
        %s380 = scalar_select %p379, %s24, 1
        %s381 = smul.addr %s380, 8
        %s382 = scalar_lea.vmem %s9, %s381
        %v384 = vld [vmem:[%s334] sm:$0xff]
        %v385 = vpack.c.bf16 %v384, %v384
        %v386 = vld [vmem:[#allocation4] sm:$0xf]
        %v387 = vld [vmem:[#allocation4 + $0x4] sm:$0xf]
        %v388 = vld [vmem:[#allocation4 + $0x8] sm:$0xf]
        %v389 = vld [vmem:[#allocation4 + $0xc] sm:$0xf]
        %v390 = vld [vmem:[%s2] sm:$0x1]
        %v392 = vperm.slane %v390, 0
        %v398 = vunpack.c.l.b16 %v386
        %v399 = vunpack.c.l.b16 %v387
        %v400 = vunpack.c.l.b16 %v388
        %v401 = vunpack.c.l.b16 %v389
        %v402 = vpack.c.b16 %v399, %v398
        %v403 = vpack.c.b16 %v401, %v400
        %vm406 = vcmask 261120
        %v408 = vsel %vm406, %v385, 0
        %410 = vmatpush.bf16.msra.mxu0 0
        %411 = vmatpush.bf16.msra.mxu0 0
        %412 = vmatpush.bf16.msra.mxu0 0
        %413 = vmatpush.bf16.msra.mxu0 0
        %414 = vmatpush.bf16.msra.mxu0 0
        %415 = vmatpush.bf16.msra.mxu0 0
        %416 = vmatpush.bf16.msra.mxu0 %v403
        %417 = vmatpush.bf16.msra.mxu0 %v402
        %418 = vmatmul.bf16.gmra.mxu0 %v408
        %v419 = vpop.f32.mrf.mxu0
        %v420 = vadd.f32 %v392, %v419
        %v421 = vpop.f32.mrf.mxu0
        %422 = vdwg.mxu0
        %v423 = vmax.f32 %v420, 0.0
        %v424 = vpack.c.bf16 %v423, %v423
        %v425 = vld [vmem:[%s3] sm:$0xf]
        %v426 = vld [vmem:[%s3 + $0x4] sm:$0xf]
        %v427 = vld [vmem:[%s3 + $0x8] sm:$0xf]
        %v428 = vld [vmem:[%s3 + $0xc] sm:$0xf]
        %v429 = vld [vmem:[%s3 + $0x10] sm:$0xf]
        %v430 = vld [vmem:[%s3 + $0x14] sm:$0xf]
        %v431 = vld [vmem:[%s3 + $0x18] sm:$0xf]
        %v432 = vld [vmem:[%s3 + $0x1c] sm:$0xf]
        %v433 = vld [vmem:[%s3 + $0x20] sm:$0xf]
        %v434 = vld [vmem:[%s3 + $0x24] sm:$0xf]
        %v435 = vld [vmem:[%s3 + $0x28] sm:$0xf]
        %v436 = vld [vmem:[%s3 + $0x2c] sm:$0xf]
        %v437 = vld [vmem:[%s3 + $0x30] sm:$0xf]
        %v438 = vld [vmem:[%s3 + $0x34] sm:$0xf]
        %v439 = vld [vmem:[%s3 + $0x38] sm:$0xf]
        %v440 = vld [vmem:[%s3 + $0x3c] sm:$0xf]
        %v441 = vld [vmem:[%s4] sm:$0x1]
        %v443 = vperm.slane %v441, 0
        %v461 = vunpack.c.l.b16 %v425
        %v462 = vunpack.c.l.b16 %v426
        %v463 = vunpack.c.l.b16 %v427
        %v464 = vunpack.c.l.b16 %v428
        %v465 = vunpack.c.l.b16 %v429
        %v466 = vunpack.c.l.b16 %v430
        %v467 = vunpack.c.l.b16 %v431
        %v468 = vunpack.c.l.b16 %v432
        %v469 = vunpack.c.l.b16 %v433
        %v470 = vunpack.c.l.b16 %v434
        %v471 = vunpack.c.l.b16 %v435
        %v472 = vunpack.c.l.b16 %v436
        %v473 = vunpack.c.l.b16 %v437
        %v474 = vunpack.c.l.b16 %v438
        %v475 = vunpack.c.l.b16 %v439
        %v476 = vunpack.c.l.b16 %v440
        %v477 = vpack.c.b16 %v462, %v461
        %v478 = vpack.c.b16 %v464, %v463
        %v479 = vpack.c.b16 %v466, %v465
        %v480 = vpack.c.b16 %v468, %v467
        %v481 = vpack.c.b16 %v470, %v469
        %v482 = vpack.c.b16 %v472, %v471
        %v483 = vpack.c.b16 %v474, %v473
        %v484 = vpack.c.b16 %v476, %v475
        %493 = vmatpush.bf16.msra.mxu0 %v484
        %494 = vmatpush.bf16.msra.mxu0 %v483
        %495 = vmatpush.bf16.msra.mxu0 %v482
        %496 = vmatpush.bf16.msra.mxu0 %v481
        %497 = vmatpush.bf16.msra.mxu0 %v480
        %498 = vmatpush.bf16.msra.mxu0 %v479
        %499 = vmatpush.bf16.msra.mxu0 %v478
        %500 = vmatpush.bf16.msra.mxu0 %v477
        %501 = vmatmul.bf16.gmra.mxu0 %v424
        %v502 = vpop.f32.mrf.mxu0
        %v503 = vadd.f32 %v443, %v502
        %v504 = vpop.f32.mrf.mxu0
        %505 = vdwg.mxu0
        %v506 = vmax.f32 %v503, 0.0
        %v507 = vpack.c.bf16 %v506, %v506
        %v508 = vld [vmem:[#allocation6] sm:$0xf]
        %v509 = vld [vmem:[#allocation6 + $0x4] sm:$0xf]
        %v510 = vld [vmem:[#allocation6 + $0x8] sm:$0xf]
        %v511 = vld [vmem:[#allocation6 + $0xc] sm:$0xf]
        %v512 = vld [vmem:[#allocation6 + $0x10] sm:$0xf]
        %v513 = vld [vmem:[#allocation6 + $0x14] sm:$0xf]
        %v514 = vld [vmem:[#allocation6 + $0x18] sm:$0xf]
        %v515 = vld [vmem:[#allocation6 + $0x1c] sm:$0xf]
        %v516 = vld [vmem:[#allocation6 + $0x20] sm:$0xf]
        %v517 = vld [vmem:[#allocation6 + $0x24] sm:$0xf]
        %v518 = vld [vmem:[#allocation6 + $0x28] sm:$0xf]
        %v519 = vld [vmem:[#allocation6 + $0x2c] sm:$0xf]
        %v520 = vld [vmem:[#allocation6 + $0x30] sm:$0xf]
        %v521 = vld [vmem:[#allocation6 + $0x34] sm:$0xf]
        %v522 = vld [vmem:[#allocation6 + $0x38] sm:$0xf]
        %v523 = vld [vmem:[#allocation6 + $0x3c] sm:$0xf]
        %v524 = vld [vmem:[%s6] sm:$0x1]
        %v526 = vperm.slane %v524, 0
        %v544 = vunpack.c.l.b16 %v508
        %v545 = vunpack.c.l.b16 %v509
        %v546 = vunpack.c.l.b16 %v510
        %v547 = vunpack.c.l.b16 %v511
        %v548 = vunpack.c.l.b16 %v512
        %v549 = vunpack.c.l.b16 %v513
        %v550 = vunpack.c.l.b16 %v514
        %v551 = vunpack.c.l.b16 %v515
        %v552 = vunpack.c.l.b16 %v516
        %v553 = vunpack.c.l.b16 %v517
        %v554 = vunpack.c.l.b16 %v518
        %v555 = vunpack.c.l.b16 %v519
        %v556 = vunpack.c.l.b16 %v520
        %v557 = vunpack.c.l.b16 %v521
        %v558 = vunpack.c.l.b16 %v522
        %v559 = vunpack.c.l.b16 %v523
        %v560 = vpack.c.b16 %v545, %v544
        %v561 = vpack.c.b16 %v547, %v546
        %v562 = vpack.c.b16 %v549, %v548
        %v563 = vpack.c.b16 %v551, %v550
        %v564 = vpack.c.b16 %v553, %v552
        %v565 = vpack.c.b16 %v555, %v554
        %v566 = vpack.c.b16 %v557, %v556
        %v567 = vpack.c.b16 %v559, %v558
        %576 = vmatpush.bf16.msra.mxu0 %v567
        %577 = vmatpush.bf16.msra.mxu0 %v566
        %578 = vmatpush.bf16.msra.mxu0 %v565
        %579 = vmatpush.bf16.msra.mxu0 %v564
        %580 = vmatpush.bf16.msra.mxu0 %v563
        %581 = vmatpush.bf16.msra.mxu0 %v562
        %582 = vmatpush.bf16.msra.mxu0 %v561
        %583 = vmatpush.bf16.msra.mxu0 %v560
        %584 = vmatmul.bf16.gmra.mxu0 %v507
        %v585 = vpop.f32.mrf.mxu0
        %v586 = vadd.f32 %v526, %v585
        %v587 = vpop.f32.mrf.mxu0
        %588 = vdwg.mxu0
        %v589 = vmax.f32 %v586, 0.0
        %v590 = vpack.c.bf16 %v589, %v589
        %v591 = vld [vmem:[%s7] sm:$0xf]
        %v592 = vld [vmem:[%s7 + $0x4] sm:$0xf]
        %v593 = vld [vmem:[%s7 + $0x8] sm:$0xf]
        %v594 = vld [vmem:[%s7 + $0xc] sm:$0xf]
        %v595 = vld [vmem:[%s7 + $0x10] sm:$0xf]
        %v596 = vld [vmem:[%s7 + $0x14] sm:$0xf]
        %v597 = vld [vmem:[%s7 + $0x18] sm:$0xf]
        %v598 = vld [vmem:[%s7 + $0x1c] sm:$0xf]
        %v599 = vld [vmem:[%s7 + $0x20] sm:$0xf]
        %v600 = vld [vmem:[%s7 + $0x24] sm:$0xf]
        %v601 = vld [vmem:[%s7 + $0x28] sm:$0xf]
        %v602 = vld [vmem:[%s7 + $0x2c] sm:$0xf]
        %v603 = vld [vmem:[%s7 + $0x30] sm:$0xf]
        %v604 = vld [vmem:[%s7 + $0x34] sm:$0xf]
        %v605 = vld [vmem:[%s7 + $0x38] sm:$0xf]
        %v606 = vld [vmem:[%s7 + $0x3c] sm:$0xf]
        %v607 = vld [vmem:[%s8] sm:$0x1]
        %v609 = vperm.slane %v607, 0
        %v627 = vunpack.c.l.b16 %v591
        %v628 = vunpack.c.l.b16 %v592
        %v629 = vunpack.c.l.b16 %v593
        %v630 = vunpack.c.l.b16 %v594
        %v631 = vunpack.c.l.b16 %v595
        %v632 = vunpack.c.l.b16 %v596
        %v633 = vunpack.c.l.b16 %v597
        %v634 = vunpack.c.l.b16 %v598
        %v635 = vunpack.c.l.b16 %v599
        %v636 = vunpack.c.l.b16 %v600
        %v637 = vunpack.c.l.b16 %v601
        %v638 = vunpack.c.l.b16 %v602
        %v639 = vunpack.c.l.b16 %v603
        %v640 = vunpack.c.l.b16 %v604
        %v641 = vunpack.c.l.b16 %v605
        %v642 = vunpack.c.l.b16 %v606
        %v643 = vpack.c.b16 %v628, %v627
        %v644 = vpack.c.b16 %v630, %v629
        %v645 = vpack.c.b16 %v632, %v631
        %v646 = vpack.c.b16 %v634, %v633
        %v647 = vpack.c.b16 %v636, %v635
        %v648 = vpack.c.b16 %v638, %v637
        %v649 = vpack.c.b16 %v640, %v639
        %v650 = vpack.c.b16 %v642, %v641
        %659 = vmatpush.bf16.msra.mxu0 %v650
        %660 = vmatpush.bf16.msra.mxu0 %v649
        %661 = vmatpush.bf16.msra.mxu0 %v648
        %662 = vmatpush.bf16.msra.mxu0 %v647
        %663 = vmatpush.bf16.msra.mxu0 %v646
        %664 = vmatpush.bf16.msra.mxu0 %v645
        %665 = vmatpush.bf16.msra.mxu0 %v644
        %666 = vmatpush.bf16.msra.mxu0 %v643
        %667 = vmatmul.bf16.gmra.mxu0 %v590
        %v668 = vpop.f32.mrf.mxu0
        %v669 = vadd.f32 %v609, %v668
        %v670 = vpop.f32.mrf.mxu0
        %671 = vdwg.mxu0
        %vm672 = vcmask 64512
        %673 = vst.msk [vmem:[%s382] sm:$0xff] %vm672, %v669
        %p674 = scmp.lt.s32.totalorder %s24, 1
        %s675 = scalar_select %p674, %s24, 1
        %s676 = smul.addr %s675, 8
        %s677 = scalar_lea.vmem %s9, %s676
        // Predicated region
        $region69: #{simple_mlp_forward.1} parent=55 // pred_check
          %p678 = pneg %p236
        $region70: #{simple_mlp_forward.1} parent=55 // pred_check_branch
          %680 = sbr.rel (%p678) target = $region72
        $region71: #{simple_mlp_forward.1} parent=55 // pred_region
          _
        $region72: #{simple_mlp_forward.1} parent=55 // pred_fallthru
          _
      $region56: #{simple_mlp_forward.1} parent=5 // pred_fallthru
        _
      %p681 = scmp.le.s32.totalorder 2, %s19
      // Predicated region
      $region73: #{simple_mlp_forward.1} parent=5 // pred_check
        %p682 = pneg %p681
      $region74: #{simple_mlp_forward.1} parent=5 // pred_check_branch
        %684 = sbr.rel (%p682) target = $region76
      $region75: #{simple_mlp_forward.1} parent=5 // pred_region
        %s685 = ssub.s32 %s19, 2
        // Predicated region
        $region77: #{simple_mlp_forward.1} parent=75 // pred_check
          %p686 = pneg %p242
        $region78: #{simple_mlp_forward.1} parent=75 // pred_check_branch
          %688 = sbr.rel (%p686) target = $region80
        $region79: #{simple_mlp_forward.1} parent=75 // pred_region
          %p689 = scmp.lt.s32.totalorder %s25, 1
          %s690 = scalar_select %p689, %s25, 1
          %s691 = smul.addr %s690, 8
          %s692 = scalar_lea.vmem %s9, %s691
        $region80: #{simple_mlp_forward.1} parent=75 // pred_fallthru
          _
      $region76: #{simple_mlp_forward.1} parent=5 // pred_fallthru
        _
    $region6: #{simple_mlp_forward.1} parent=1 // loop_footer
      %s23 = sadd.s32 1, %s19
    $region7: #{simple_mlp_forward.1} parent=1 // loop_footer_branch
      %18 = sbr.rel target = $region3
    $region8: #{simple_mlp_forward.1} parent=1 // loop_exit
      _
    %693 = vsyncpa [#allocation3], 1
    %s694 = scalar_lea.sflag [#allocation3], 1
    %695 = vsyncpa %s694, 1
    %696 = vsyncpa [#allocation5], 1

</llo_original>
